<compile_context>
chip_gen: v6e
topology: v6e:2x2x1
jax: 0.10.0
libtpu: 0.0.40
codegen_flags: <defaults>
</compile_context>

<pallas_src>
import functools

import jax
import jax.numpy as jnp
from jax import lax
from jax.experimental import pallas as pl
from jax.experimental.pallas import tpu as pltpu


def _round_up(x, m):
    return (x + m - 1) // m * m


def _gconv_kernel(w_ref, b_ref, p_ref, o_ref, *, co_p):
    # w_ref: (2*Co_p, K)  resident fused [W_l ; W_s] (transposed layout)
    # b_ref: (2*Co_p, 1)  resident fused [b_l ; b_s]
    # p_ref: (K, TM)      streamed im2col columns for this tile
    # o_ref: (Co_p, TM)   gated output tile (lane-dense)
    y = jnp.dot(w_ref[...], p_ref[...], preferred_element_type=jnp.float32)
    y = y + b_ref[...]                                   # lane-broadcast bias add
    o_ref[...] = y[:co_p, :] * jax.nn.sigmoid(y[co_p:, :])


def _pick_tm(k, co_p, how, budget_bytes=16 << 20, cap=4096):
    # Double-buffered streamed patch block + double-buffered output block, f32.
    per_col = 2 * 4 * (k + co_p)
    tm = min(cap, max(128, budget_bytes // per_col))
    tm = (tm // 128) * 128
    tm = min(tm, _round_up(how, 128))                    # don't over-allocate small images
    return max(tm, 128)


def g_conv2d(x, w_l, b_l, w_s, b_s, stride=(1, 1), padding=(0, 0), tm=None):
    """Gated conv2d: conv_l(x) * sigmoid(conv_s(x)). x NCHW, w_*: (Cout,C,kh,kw)."""
    N, C, H, W = x.shape
    Cout, _, kh, kw = w_l.shape
    sh, sw = stride
    ph, pw = padding
    Ho = (H + 2 * ph - kh) // sh + 1
    Wo = (W + 2 * pw - kw) // sw + 1
    HoWo = Ho * Wo
    K = C * kh * kw

    # im2col in native (N, K, Ho, Wo) layout; feature ordering is channel-major
    # (C, kh, kw), matching PyTorch's weight.reshape(Cout, C*kh*kw).
    patches = lax.conv_general_dilated_patches(
        x, (kh, kw), stride, [(ph, ph), (pw, pw)])       # (N, K, Ho, Wo)
    P = patches.reshape(N, K, HoWo)                      # free reshape (merge trailing dims)

    Co_p = _round_up(Cout, 8)                            # sublane-aligned output channels
    if tm is None:
        tm = _pick_tm(K, Co_p, HoWo)
    tm = max(128, (tm // 128) * 128)
    Mp = _round_up(HoWo, tm)
    if Mp != HoWo:                                       # no-op when tm | Ho*Wo
        P = jnp.pad(P, ((0, 0), (0, 0), (0, Mp - HoWo)))

    def pad_wt(w):                                       # (Cout,C,kh,kw) -> (Co_p, K)
        return jnp.pad(w.reshape(Cout, K), ((0, Co_p - Cout), (0, 0)))

    W_fused = jnp.concatenate([pad_wt(w_l), pad_wt(w_s)], axis=0)       # (2*Co_p, K)
    B_fused = jnp.concatenate(
        [jnp.pad(b_l, (0, Co_p - Cout)), jnp.pad(b_s, (0, Co_p - Cout))]
    ).reshape(2 * Co_p, 1)                                              # (2*Co_p, 1)

    grid = (N, Mp // tm)
    kernel = functools.partial(_gconv_kernel, co_p=Co_p)

    out = pl.pallas_call(
        kernel,
        out_shape=jax.ShapeDtypeStruct((N, Co_p, Mp), jnp.float32),
        grid_spec=pltpu.PrefetchScalarGridSpec(
            num_scalar_prefetch=0,
            grid=grid,
            in_specs=[
                pl.BlockSpec((2 * Co_p, K), lambda n, m: (0, 0)),     # weights (resident)
                pl.BlockSpec((2 * Co_p, 1), lambda n, m: (0, 0)),     # bias (resident)
                pl.BlockSpec((None, K, tm), lambda n, m: (n, 0, m)),  # patches (streamed)
            ],
            out_specs=pl.BlockSpec((None, Co_p, tm), lambda n, m: (n, 0, m)),
        ),
        compiler_params=pltpu.CompilerParams(
            dimension_semantics=("parallel", "parallel"),
            vmem_limit_bytes=32 * 1024 * 1024,
        ),
        cost_estimate=pl.CostEstimate(
            flops=int(2 * (2 * Co_p) * K * N * Mp),
            transcendentals=int(N * Co_p * Mp),
            bytes_accessed=int(4 * (N * K * Mp + 2 * Co_p * K + 2 * Co_p
                                    + N * Co_p * Mp)),
        ),
    )(W_fused, B_fused, P)

    # Strip channel / spatial padding (no-op when already aligned); reshape is free.
    return out[:, :Cout, :HoWo].reshape(N, Cout, Ho, Wo)


def _reference(x, w_l, b_l, w_s, b_s, stride, padding):
    dn = lax.conv_dimension_numbers(x.shape, w_l.shape, ("NCHW", "OIHW", "NCHW"))
    pad = [(padding[0], padding[0]), (padding[1], padding[1])]
    cl = lax.conv_general_dilated(x, w_l, stride, pad, dimension_numbers=dn)
    cs = lax.conv_general_dilated(x, w_s, stride, pad, dimension_numbers=dn)
    cl = cl + b_l[None, :, None, None]
    cs = cs + b_s[None, :, None, None]
    return cl * jax.nn.sigmoid(cs)


if __name__ == "__main__":
    # Small shapes consistent with the module: N=2, Cin=4, H=W=16, Cout=8, k=3x3.
    N, Cin, H, W = 2, 4, 16, 16
    Cout, kh, kw = 8, 3, 3
    stride, padding = (1, 1), (1, 1)

    key = jax.random.PRNGKey(0)
    kx, kwl, kbl, kws, kbs = jax.random.split(key, 5)
    x = jax.random.normal(kx, (N, Cin, H, W), jnp.float32)
    w_l = jax.random.normal(kwl, (Cout, Cin, kh, kw), jnp.float32) * 0.1
    b_l = jax.random.normal(kbl, (Cout,), jnp.float32) * 0.1
    w_s = jax.random.normal(kws, (Cout, Cin, kh, kw), jnp.float32) * 0.1
    b_s = jax.random.normal(kbs, (Cout,), jnp.float32) * 0.1

    out = g_conv2d(x, w_l, b_l, w_s, b_s, stride=stride, padding=padding)
    out = jax.block_until_ready(out)

    ref = _reference(x, w_l, b_l, w_s, b_s, stride, padding)
    assert out.shape == (N, Cout, H, W), out.shape
    err = float(jnp.max(jnp.abs(out - ref)))
    assert jnp.allclose(out, ref, atol=2e-4, rtol=2e-4), err

    print("KERNEL_OK")
</pallas_src>

<mosaic_0001>
module attributes {stable_mosaic.version = 11 : i64} {
  func.func @_gconv_kernel(%arg0: i32, %arg1: i32, %arg2: memref<16x36xf32, #tpu.memory_space<vmem>>, %arg3: memref<16x1xf32, #tpu.memory_space<vmem>>, %arg4: memref<1x36x256xf32, #tpu.memory_space<vmem>>, %arg5: memref<1x8x256xf32, #tpu.memory_space<vmem>>) attributes {dimension_semantics = [#tpu.dimension_semantics<parallel>, #tpu.dimension_semantics<parallel>], iteration_bounds = array<i64: 2, 1>, scalar_prefetch = 0 : i64, scratch_operands = 0 : i64, tpu.core_type = #tpu.core_type<tc>, window_params = [{pipeline_mode = #tpu.pipeline_mode<synchronous>, transform_indices = @transform_0, window_bounds = array<i64: 16, 36>}, {pipeline_mode = #tpu.pipeline_mode<synchronous>, transform_indices = @transform_1, window_bounds = array<i64: 16, 1>}, {transform_indices = @transform_2, window_bounds = array<i64: 1, 36, 256>}, {transform_indices = @transform_3, window_bounds = array<i64: 1, 8, 256>}]} {
    %c0 = arith.constant 0 : index
    %c0_0 = arith.constant 0 : index
    %0 = vector.load %arg2[%c0, %c0_0] : memref<16x36xf32, #tpu.memory_space<vmem>>, vector<16x36xf32>
    %c0_1 = arith.constant 0 : index
    %c0_2 = arith.constant 0 : index
    %c0_3 = arith.constant 0 : index
    %1 = vector.load %arg4[%c0_1, %c0_2, %c0_3] : memref<1x36x256xf32, #tpu.memory_space<vmem>>, vector<1x36x256xf32>
    %2 = vector.shape_cast %1 : vector<1x36x256xf32> to vector<36x256xf32>
    %cst = arith.constant dense<0.000000e+00> : vector<16x256xf32>
    %3 = tpu.matmul %0, %2, %cst {dimension_numbers = #tpu.dot_dimension_numbers<[1], [0], [0], [1], [0, 0, 1, 1], [], []>} : vector<16x36xf32>, vector<36x256xf32>, vector<16x256xf32> -> vector<16x256xf32>
    %c0_4 = arith.constant 0 : index
    %c0_5 = arith.constant 0 : index
    %4 = vector.load %arg3[%c0_4, %c0_5] : memref<16x1xf32, #tpu.memory_space<vmem>>, vector<16x1xf32>
    %5 = vector.broadcast %4 : vector<16x1xf32> to vector<16x256xf32>
    %6 = arith.addf %3, %5 : vector<16x256xf32>
    %7 = vector.extract_strided_slice %6 {offsets = [0, 0], sizes = [8, 256], strides = [1, 1]} : vector<16x256xf32> to vector<8x256xf32>
    %8 = vector.extract_strided_slice %6 {offsets = [8, 0], sizes = [8, 256], strides = [1, 1]} : vector<16x256xf32> to vector<8x256xf32>
    %9 = arith.negf %8 : vector<8x256xf32>
    %10 = math.exp %9 : vector<8x256xf32>
    %cst_6 = arith.constant 1.000000e+00 : f32
    %11 = vector.broadcast %cst_6 : f32 to vector<8x256xf32>
    %12 = arith.addf %11, %10 : vector<8x256xf32>
    %13 = arith.divf %11, %12 : vector<8x256xf32>
    %14 = arith.mulf %7, %13 : vector<8x256xf32>
    %c0_7 = arith.constant 0 : index
    %c0_8 = arith.constant 0 : index
    %c0_9 = arith.constant 0 : index
    %15 = vector.load %arg5[%c0_7, %c0_8, %c0_9] : memref<1x8x256xf32, #tpu.memory_space<vmem>>, vector<1x8x256xf32>
    %16 = vector.shape_cast %15 : vector<1x8x256xf32> to vector<8x256xf32>
    %17 = vector.shape_cast %14 : vector<8x256xf32> to vector<1x8x256xf32>
    tpu.vector_store %arg5[%c0_7, %c0_8, %c0_9], %17 {strides = array<i32>} : memref<1x8x256xf32, #tpu.memory_space<vmem>>, vector<1x8x256xf32>,
    return
  }
  func.func @transform_0(%arg0: i32, %arg1: i32) -> (i32, i32) {
    %c0_i32 = arith.constant 0 : i32
    %c0_i32_0 = arith.constant 0 : i32
    %c0_i32_1 = arith.constant 0 : i32
    return %c0_i32, %c0_i32_0 : i32, i32
  }
  func.func @transform_1(%arg0: i32, %arg1: i32) -> (i32, i32) {
    %c0_i32 = arith.constant 0 : i32
    %c0_i32_0 = arith.constant 0 : i32
    %c0_i32_1 = arith.constant 0 : i32
    return %c0_i32, %c0_i32_0 : i32, i32
  }
  func.func @transform_2(%arg0: i32, %arg1: i32) -> (i32, i32, i32) {
    %c0_i32 = arith.constant 0 : i32
    %c0_i32_0 = arith.constant 0 : i32
    return %arg0, %c0_i32, %arg1 : i32, i32, i32
  }
  func.func @transform_3(%arg0: i32, %arg1: i32) -> (i32, i32, i32) {
    %c0_i32 = arith.constant 0 : i32
    %c0_i32_0 = arith.constant 0 : i32
    return %arg0, %c0_i32, %arg1 : i32, i32, i32
  }
}

</mosaic_0001>

<llo_original>
// kernel: tpu_custom_call.1
$region0: #{tpu_custom_call.1}
  #allocation0 [shape = 'u32[]', space=smem, size = 0x4, offset = 0x4, fixed_abs, tag = 'smem constant byte address 0x4 - core index']
  #allocation1 [shape = 'u32[144,128]{1,0:T(1,128)}', space=vmem, size = 0x12000, scoped, tag = 'internal scratch']
  %s0 = inlined_call_operand.vmem [shape: f32[16,36], index: 0, kind: input, shape index: {}]
  %s1 = inlined_call_operand.vmem [shape: f32[16,1], index: 1, kind: input, shape index: {}]
  %s2 = inlined_call_operand.vmem [shape: f32[2,36,256], index: 2, kind: input, shape index: {}]
  %s3 = inlined_call_operand.hbm [shape: f32[2,8,256], index: 3, kind: output, shape index: {}]
  %s4 = sld [smem:[#allocation0]]
  $region45: #{tpu_custom_call.1} parent=0
    _
  %s6 = ssub.s32 1, %s4
  %s7 = scalar_select 0, %s6, %s4
  $region1: #{tpu_custom_call.1} parent=0
    #allocation2 [shape = 'u8[16384]{0}', space=vmem, size = 0x4000, scoped, tag = 'output window, operand 0']
    #allocation3 [shape = 's32[2]{0}', space=sflag, size = 0x8, scoped, tag = 'scoped memory for tpu_custom_call.1']
    %8 = vsyncpa [#allocation3], 0
    %s9 = scalar_lea.sflag [#allocation3], 1
    %10 = vsyncpa %s9, 0
    loop: start=0, step=1, limit=4
    $region2: #{tpu_custom_call.1} parent=1 // loop_pre_header
      _
    $region3: #{tpu_custom_call.1} parent=1 // loop_header
      %s12 = sphi 0, %s16
      %p13 = scmp.ge.s32.totalorder %s12, 4
      %s19 = sphi 0, %s31
      %s20 = sphi 0, %s27
      %s21 = sphi 0, %s19
      %s22 = sphi 0, %s20
      %s23 = sphi 0, %s21
      %s24 = sphi 0, %s22
      %s32 = sphi 0, %s32
      %s34 = sphi 0, %s32
      %s35 = sphi 0, %s34
      %s49 = sphi 0, %s35
      %s53 = sphi 0, %s53
      %s55 = sphi 0, %s53
      %s56 = sphi 0, %s55
      %s70 = sphi 0, %s56
      %s78 = sphi 0, %s80
      %s81 = sphi 0, %s78
      %s82 = sphi 0, %s81
      %s98 = sphi 0, %s82
      %s106 = sphi 0, %s108
      %s109 = sphi 0, %s106
      %s110 = sphi 0, %s109
      %s126 = sphi 0, %s110
    $region4: #{tpu_custom_call.1} parent=1 // loop_header_branch
      %15 = sbr.rel (%p13) target = $region8
    $region5: #{tpu_custom_call.1} parent=1 // loop_body
      %s17 = ssub.s32 %s12, 1
      %s18 = ssub.s32 %s12, 2
      %s25 = sadd.s32 1, %s20
      %p26 = scmp.ge.s32.totalorder %s25, 1
      %s27 = scalar_select %p26, 0, %s25
      %s28 = sadd.s32 1, %s19
      %s29 = scalar_select %p26, %s28, %s19
      %p30 = scmp.ge.s32.totalorder %s29, 2
      %s31 = scalar_select %p30, 0, %s29
      %s33 = sadd.s32 %s32, 1
      %p36 = scmp.eq.s32.totalorder %s12, 1
      %p37 = scmp.ne.s32.totalorder %s32, %s34
      %p38 = scmp.eq.s32.totalorder %s12, 0
      %p39 = por %p37, %p38
      %p40 = scmp.ne.s32.totalorder %s32, %s34
      %p41 = scmp.eq.s32.totalorder %s17, 1
      %p42 = por %p40, %p41
      %p43 = scmp.ne.s32.totalorder %s34, %s35
      %p44 = scmp.eq.s32.totalorder %s17, 0
      %p45 = por %p43, %p44
      %p46 = scmp.ne.s32.totalorder %s34, %s35
      %p47 = scmp.eq.s32.totalorder %s18, 1
      %p48 = por %p46, %p47
      %p50 = scmp.ne.s32.totalorder %s35, %s49
      %p51 = scmp.eq.s32.totalorder %s18, 0
      %p52 = por %p50, %p51
      %s54 = sadd.s32 %s53, 1
      %p57 = scmp.eq.s32.totalorder %s12, 1
      %p58 = scmp.ne.s32.totalorder %s53, %s55
      %p59 = scmp.eq.s32.totalorder %s12, 0
      %p60 = por %p58, %p59
      %p61 = scmp.ne.s32.totalorder %s53, %s55
      %p62 = scmp.eq.s32.totalorder %s17, 1
      %p63 = por %p61, %p62
      %p64 = scmp.ne.s32.totalorder %s55, %s56
      %p65 = scmp.eq.s32.totalorder %s17, 0
      %p66 = por %p64, %p65
      %p67 = scmp.ne.s32.totalorder %s55, %s56
      %p68 = scmp.eq.s32.totalorder %s18, 1
      %p69 = por %p67, %p68
      %p71 = scmp.ne.s32.totalorder %s56, %s70
      %p72 = scmp.eq.s32.totalorder %s18, 0
      %p73 = por %p71, %p72
      %s74 = ssub.s32 %s19, %s31
      %s75 = ssub.s32 %s20, %s27
      %s76 = sor.u32 %s74, %s75
      %p77 = scmp.eq.s32.totalorder %s76, 0
      %s79 = sadd.s32 %s78, 1
      %s80 = scalar_select %p77, %s78, %s79
      %p83 = pneg %p77
      %p84 = scmp.eq.s32.totalorder %s12, 1
      %p85 = por %p83, %p84
      %p86 = scmp.ne.s32.totalorder %s78, %s81
      %p87 = scmp.eq.s32.totalorder %s12, 0
      %p88 = por %p86, %p87
      %p89 = scmp.ne.s32.totalorder %s78, %s81
      %p90 = scmp.eq.s32.totalorder %s17, 1
      %p91 = por %p89, %p90
      %p92 = scmp.ne.s32.totalorder %s81, %s82
      %p93 = scmp.eq.s32.totalorder %s17, 0
      %p94 = por %p92, %p93
      %p95 = scmp.ne.s32.totalorder %s81, %s82
      %p96 = scmp.eq.s32.totalorder %s18, 1
      %p97 = por %p95, %p96
      %p99 = scmp.ne.s32.totalorder %s82, %s98
      %p100 = scmp.eq.s32.totalorder %s18, 0
      %p101 = por %p99, %p100
      %s102 = ssub.s32 %s19, %s31
      %s103 = ssub.s32 %s20, %s27
      %s104 = sor.u32 %s102, %s103
      %p105 = scmp.eq.s32.totalorder %s104, 0
      %s107 = sadd.s32 %s106, 1
      %s108 = scalar_select %p105, %s106, %s107
      %p111 = pneg %p105
      %p112 = scmp.eq.s32.totalorder %s12, 1
      %p113 = por %p111, %p112
      %p114 = scmp.ne.s32.totalorder %s106, %s109
      %p115 = scmp.eq.s32.totalorder %s12, 0
      %p116 = por %p114, %p115
      %p117 = scmp.ne.s32.totalorder %s106, %s109
      %p118 = scmp.eq.s32.totalorder %s17, 1
      %p119 = por %p117, %p118
      %p120 = scmp.ne.s32.totalorder %s109, %s110
      %p121 = scmp.eq.s32.totalorder %s17, 0
      %p122 = por %p120, %p121
      %p123 = scmp.ne.s32.totalorder %s109, %s110
      %p124 = scmp.eq.s32.totalorder %s18, 1
      %p125 = por %p123, %p124
      %p127 = scmp.ne.s32.totalorder %s110, %s126
      %p128 = scmp.eq.s32.totalorder %s18, 0
      %p129 = por %p127, %p128
      %p130 = scmp.le.s32.totalorder 1, %s12
      %p131 = scmp.lt.s32.totalorder %s12, 3
      %p132 = pnand %p130, %p131
      %p133 = pneg %p132
      // Predicated region
      $region9: #{tpu_custom_call.1} parent=5 // pred_check
        _
      $region10: #{tpu_custom_call.1} parent=5 // pred_check_branch
        %135 = sbr.rel (%p132) target = $region12
      $region11: #{tpu_custom_call.1} parent=5 // pred_region
        %s136 = ssub.s32 %s12, 1
        // Predicated region
        $region13: #{tpu_custom_call.1} parent=11 // pred_check
          %p137 = pneg %p45
        $region14: #{tpu_custom_call.1} parent=11 // pred_check_branch
          %139 = sbr.rel (%p137) target = $region16
        $region15: #{tpu_custom_call.1} parent=11 // pred_region
          _
        $region16: #{tpu_custom_call.1} parent=11 // pred_fallthru
          _
        // Predicated region
        $region17: #{tpu_custom_call.1} parent=11 // pred_check
          %p140 = pneg %p66
        $region18: #{tpu_custom_call.1} parent=11 // pred_check_branch
          %142 = sbr.rel (%p140) target = $region20
        $region19: #{tpu_custom_call.1} parent=11 // pred_region
          _
        $region20: #{tpu_custom_call.1} parent=11 // pred_fallthru
          _
      $region12: #{tpu_custom_call.1} parent=5 // pred_fallthru
        _
      %p143 = scmp.lt.s32.totalorder %s12, 2
      // Predicated region
      $region21: #{tpu_custom_call.1} parent=5 // pred_check
        %p144 = pneg %p143
      $region22: #{tpu_custom_call.1} parent=5 // pred_check_branch
        %146 = sbr.rel (%p144) target = $region24
      $region23: #{tpu_custom_call.1} parent=5 // pred_region
        // Predicated region
        $region25: #{tpu_custom_call.1} parent=23 // pred_check
          %p147 = pneg %p88
        $region26: #{tpu_custom_call.1} parent=23 // pred_check_branch
          %149 = sbr.rel (%p147) target = $region28
        $region27: #{tpu_custom_call.1} parent=23 // pred_region
          %s150 = smul.u32 2, %s20
          %p151 = scmp.lt.s32.totalorder %s19, 1
          %s152 = scalar_select %p151, %s19, 1
          %p153 = scmp.lt.s32.totalorder %s150, 1
          %s154 = scalar_select %p153, %s150, 1
          %s155 = smul.addr %s152, 10
          %s156 = sadd.s32 %s154, %s155
          %s157 = smul.addr %s156, 8
          %s158 = scalar_lea.vmem %s2, %s157
          %s159 = smul.u32 2, %s20
        $region28: #{tpu_custom_call.1} parent=23 // pred_fallthru
          _
      $region24: #{tpu_custom_call.1} parent=5 // pred_fallthru
        _
      %p160 = scmp.le.s32.totalorder 1, %s12
      %p161 = scmp.lt.s32.totalorder %s12, 3
      %p162 = pnand %p160, %p161
      %p163 = pneg %p162
      // Predicated region
      $region29: #{tpu_custom_call.1} parent=5 // pred_check
        _
      $region30: #{tpu_custom_call.1} parent=5 // pred_check_branch
        %165 = sbr.rel (%p162) target = $region32
      $region31: #{tpu_custom_call.1} parent=5 // pred_region
        %s166 = ssub.s32 %s12, 1
        %p167 = pneg %p45
        %p168 = pneg %p42
        %p169 = pneg %p66
        %p170 = pneg %p63
        %s171 = smul.u32 2, %s22
        %p172 = scmp.lt.s32.totalorder %s21, 1
        %s173 = scalar_select %p172, %s21, 1
        %p174 = scmp.lt.s32.totalorder %s171, 1
        %s175 = scalar_select %p174, %s171, 1
        %s176 = smul.addr %s173, 10
        %s177 = sadd.s32 %s175, %s176
        %s178 = smul.addr %s177, 8
        %s179 = scalar_lea.vmem %s2, %s178
        %p180 = pneg %p94
        %p181 = pneg %p91
        %p182 = pneg %p122
        %p183 = pneg %p119
        %s184 = sand.u32 %s109, 1
        %s185 = scalar_lea.sflag [#allocation3], %s184
        %s186 = sand.u32 %s109, 1
        %s187 = smul.addr %s186, 16
        %s188 = scalar_lea.vmem [#allocation2], %s187
        %s189 = smul.u32 2, %s22
        %p190 = scmp.lt.s32.totalorder %s21, 1
        %s191 = scalar_select %p190, %s21, 1
        %p192 = scmp.lt.s32.totalorder %s189, 1
        %s193 = scalar_select %p192, %s189, 1
        %s194 = smul.addr %s191, 10
        %s195 = sadd.s32 %s193, %s194
        %s196 = smul.addr %s195, 8
        %s197 = scalar_lea.vmem %s2, %s196
        %s198 = smul.u32 2, %s22
        %s199 = smul.u32 2, %s22
        %v200 = vld [vmem:[%s0] sm:$0xff]
        %v201 = vld [vmem:[%s0 + $0x8] sm:$0xff]
        %v202 = vld [vmem:[%s197] sm:$0xff]
        %v203 = vld [vmem:[%s197 + $0x8] sm:$0xff]
        %v204 = vld [vmem:[%s197 + $0x10] sm:$0xff]
        %v205 = vld [vmem:[%s197 + $0x18] sm:$0xff]
        %v206 = vld [vmem:[%s197 + $0x20] sm:$0xff]
        %v207 = vld [vmem:[%s197 + $0x28] sm:$0xff]
        %v208 = vld [vmem:[%s197 + $0x30] sm:$0xff]
        %v209 = vld [vmem:[%s197 + $0x38] sm:$0xff]
        %v210 = vld [vmem:[%s197 + $0x40] sm:$0xf]
        %v211 = vld [vmem:[%s197 + $0x48] sm:$0xf]
        %v212 = vld [vmem:[%s1] sm:$0xff]
        %v213 = vld [vmem:[%s1 + $0x8] sm:$0xff]
        %215 = vset.pattern.permute.xlu0 0
        %216 = vperm.xlu0 %215, %v212
        %v217 = vpop.permute.xlu0 %216
        %220 = vset.pattern.permute.xlu0 0
        %221 = vperm.xlu0 %220, %v213
        %v222 = vpop.permute.xlu0 %221
        %vm224 = vcmask 293888
        %v226 = vsel %vm224, %v200, 0
        %v229 = vsel %vm224, %v201, 0
        %vm231 = vcmask 1043456
        %v233 = vsel %vm231, %v210, 0
        %v236 = vsel %vm231, %v211, 0
        %238 = vmatprep.subr.mxu0 0.0
        %239 = vmatpush1.msra.mxu0 0.0
        %240 = vmatprep.subr.mxu0 0.0
        %241 = vmatpush1.msra.mxu0 0.0
        %242 = vmatprep.subr.mxu0 0.0
        %243 = vmatpush1.msra.mxu0 0.0
        %244 = vmatprep.subr.mxu0 0.0
        %245 = vmatpush1.msra.mxu0 0.0
        %246 = vmatprep.subr.mxu0 0.0
        %247 = vmatpush1.msra.mxu0 0.0
        %248 = vmatprep.subr.mxu0 0.0
        %249 = vmatpush1.msra.mxu0 0.0
        %250 = vmatprep.subr.mxu0 0.0
        %251 = vmatpush1.msra.mxu0 0.0
        %252 = vmatprep.subr.mxu0 0.0
        %253 = vmatpush1.msra.mxu0 0.0
        %254 = vmatprep.subr.mxu0 0.0
        %255 = vmatpush1.msra.mxu0 0.0
        %256 = vmatprep.subr.mxu0 0.0
        %257 = vmatpush1.msra.mxu0 0.0
        %258 = vmatprep.subr.mxu0 0.0
        %259 = vmatpush1.msra.mxu0 0.0
        %260 = vmatprep.subr.mxu0 %v236
        %261 = vmatpush1.msra.mxu0 %v233
        %262 = vmatprep.subr.mxu0 %v209
        %263 = vmatpush1.msra.mxu0 %v208
        %264 = vmatprep.subr.mxu0 %v207
        %265 = vmatpush1.msra.mxu0 %v206
        %266 = vmatprep.subr.mxu0 %v205
        %267 = vmatpush1.msra.mxu0 %v204
        %268 = vmatprep.subr.mxu0 %v203
        %269 = vmatpush1.msra.mxu0 %v202
        %270 = vmatprep.subr.mxu0 0.0
        %271 = vmatpush2.msra.mxu0 0.0
        %272 = vmatprep.subr.mxu0 0.0
        %273 = vmatpush2.msra.mxu0 0.0
        %274 = vmatprep.subr.mxu0 0.0
        %275 = vmatpush2.msra.mxu0 0.0
        %276 = vmatprep.subr.mxu0 0.0
        %277 = vmatpush2.msra.mxu0 0.0
        %278 = vmatprep.subr.mxu0 0.0
        %279 = vmatpush2.msra.mxu0 0.0
        %280 = vmatprep.subr.mxu0 0.0
        %281 = vmatpush2.msra.mxu0 0.0
        %282 = vmatprep.subr.mxu0 0.0
        %283 = vmatpush2.msra.mxu0 0.0
        %284 = vmatprep.subr.mxu0 0.0
        %285 = vmatpush2.msra.mxu0 0.0
        %286 = vmatprep.subr.mxu0 0.0
        %287 = vmatpush2.msra.mxu0 0.0
        %288 = vmatprep.subr.mxu0 0.0
        %289 = vmatpush2.msra.mxu0 0.0
        %290 = vmatprep.subr.mxu0 0.0
        %291 = vmatpush2.msra.mxu0 0.0
        %292 = vmatprep.subr.mxu0 0.0
        %293 = vmatpush2.msra.mxu0 0.0
        %294 = vmatprep.subr.mxu0 0.0
        %295 = vmatpush2.msra.mxu0 0.0
        %296 = vmatprep.subr.mxu0 0.0
        %297 = vmatpush2.msra.mxu0 0.0
        %298 = vmatprep.subr.mxu0 0.0
        %299 = vmatpush2.msra.mxu0 0.0
        %300 = vmatprep.subr.mxu0 0.0
        %301 = vmatpush2.msra.mxu0 0.0
        %302 = vmatprep.mubr.f32.mxu0 0.0
        %303 = vmatmul.mubr.f32.gmra.mxu0 %v226
        %v304 = vpop.f32.mrf.mxu0
        %v305 = vadd.f32 %v217, %v304
        %v306 = vpop.f32.mrf.mxu0
        %v307 = vadd.f32 %v217, %v306
        %308 = vmatprep.mubr.f32.mxu0 0.0
        %309 = vmatmul.mubr.f32.gmra.mxu0 %v229
        %v310 = vpop.f32.mrf.mxu0
        %v311 = vadd.f32 %v222, %v310
        %v312 = vpop.f32.mrf.mxu0
        %v313 = vadd.f32 %v222, %v312
        %314 = vdwg.mxu0
        %v315 = vxor.u32 %v311, 2147483648
        %v316 = vxor.u32 %v313, 2147483648
        %v317 = vmul.f32 %v315, 1.442695
        %v318 = vpow.pop %v317
        %v319 = vmul.f32 %v316, 1.442695
        %v320 = vpow.pop %v319
        %v321 = vadd.f32 %v318, 1.0
        %v322 = vadd.f32 %v320, 1.0
        %v323 = vrcp.pop %v321
        %v324 = vmul.f32 1.0, %v323
        %v325 = vrcp.pop %v322
        %v326 = vmul.f32 1.0, %v325
        %v327 = vmul.f32 %v305, %v324
        %v328 = vmul.f32 %v307, %v326
        %329 = vst [vmem:[%s188] sm:$0xff] %v327
        %330 = vst [vmem:[%s188 + $0x8] sm:$0xff] %v328
        %s331 = sand.u32 %s109, 1
        %s332 = scalar_lea.sflag [#allocation3], %s331
        %s333 = sand.u32 %s109, 1
        %s334 = smul.addr %s333, 16
        %s335 = scalar_lea.vmem [#allocation2], %s334
        // Predicated region
        $region33: #{tpu_custom_call.1} parent=31 // pred_check
          %p336 = pneg %p119
        $region34: #{tpu_custom_call.1} parent=31 // pred_check_branch
          %338 = sbr.rel (%p336) target = $region36
        $region35: #{tpu_custom_call.1} parent=31 // pred_region
          %s339 = smul.u32 2, %s22
          %s341 = ssub.s32 256, 256
          %342 = vsyncadd %s332, %s341
          %s343 = smul.addr %s21, 2
          %s344 = sadd.s32 %s339, %s343
          %s345 = smul.addr %s344, 128
          %s346 = scalar_lea.hbm %s3, %s345
          %s348 = sshll.u32 %s335, 4
          %s349 = int_to_ptr.vmem [resolvable:$true] %s348
          %351 = dma.vmem_to_hbm [thread:$0]  %s349, 256, %s346, %s332
        $region36: #{tpu_custom_call.1} parent=31 // pred_fallthru
          _
      $region32: #{tpu_custom_call.1} parent=5 // pred_fallthru
        _
      %p352 = scmp.le.s32.totalorder 2, %s12
      // Predicated region
      $region37: #{tpu_custom_call.1} parent=5 // pred_check
        %p353 = pneg %p352
      $region38: #{tpu_custom_call.1} parent=5 // pred_check_branch
        %355 = sbr.rel (%p353) target = $region40
      $region39: #{tpu_custom_call.1} parent=5 // pred_region
        %s356 = ssub.s32 %s12, 2
        // Predicated region
        $region41: #{tpu_custom_call.1} parent=39 // pred_check
          %p357 = pneg %p125
        $region42: #{tpu_custom_call.1} parent=39 // pred_check_branch
          %359 = sbr.rel (%p357) target = $region44
        $region43: #{tpu_custom_call.1} parent=39 // pred_region
          %s360 = sand.u32 %s110, 1
          %s361 = scalar_lea.sflag [#allocation3], %s360
          %s362 = sand.u32 %s110, 1
          %s363 = smul.addr %s362, 16
          %s364 = scalar_lea.vmem [#allocation2], %s363
          %365 = dma.done %s361, 256
        $region44: #{tpu_custom_call.1} parent=39 // pred_fallthru
          _
      $region40: #{tpu_custom_call.1} parent=5 // pred_fallthru
        _
    $region6: #{tpu_custom_call.1} parent=1 // loop_footer
      %s16 = sadd.s32 1, %s12
    $region7: #{tpu_custom_call.1} parent=1 // loop_footer_branch
      %11 = sbr.rel target = $region3
    $region8: #{tpu_custom_call.1} parent=1 // loop_exit
      _
    %366 = vsyncpa [#allocation3], 1
    %s367 = scalar_lea.sflag [#allocation3], 1
    %368 = vsyncpa %s367, 1

</llo_original>
